<compile_context>
chip_gen: v5e
topology: v5e:2x2
jax: 0.10.0
libtpu: 0.0.40
codegen_flags: <defaults>
</compile_context>

<pallas_src>
import jax
import jax.numpy as jnp
from jax.experimental import pallas as pl
from jax.experimental.pallas import tpu as pltpu


def _round_up(n, m):
    return ((n + m - 1) // m) * m


def _mlp_kernel(x_ref, w1_ref, b1_ref, w2_ref, b2_ref, out_ref):
    # In-kernel bf16 cast of the streamed activation (saves an HBM pass in the wrapper).
    x_bf = x_ref[...].astype(jnp.bfloat16)                               # (tm, d_in)
    # fc1: (tm, d_in) @ (d_in, hidden) -> (tm, hidden), f32 accumulation on the MXU.
    h = jnp.dot(x_bf, w1_ref[...], preferred_element_type=jnp.float32)
    # Bias + ReLU kept minimal, in f32 on the VPU (v5e VALU budget).
    h = jnp.maximum(h + b1_ref[...], 0.0)
    # fc2: (tm, hidden) @ (hidden, c_pad) -> (tm, c_pad), f32 accumulation.
    o = jnp.dot(h.astype(jnp.bfloat16), w2_ref[...],
                preferred_element_type=jnp.float32)
    out_ref[...] = (o + b2_ref[...]).astype(out_ref.dtype)


def _vmem_capacity_bytes():
    # Physical VMEM per TensorCore; fall back to the smallest (v7x: 64 MiB) so the
    # derived budget is always safe.
    try:
        return int(pltpu.get_tpu_info().vmem_capacity_bytes)
    except Exception:
        return 64 * 1024 * 1024


def _pick_tm(B, d_in, hidden, c_pad, vmem_budget, tm_max=512):
    """Largest 8-aligned row tile fitting the VMEM budget: resident bf16 weights +
    f32 biases, double-buffered f32 x/out tiles, and in-flight f32/bf16 temporaries."""
    resident = 2 * (d_in * hidden + hidden * c_pad) + 4 * (hidden + c_pad)
    per_row = (2 * 4 * d_in            # x f32, double-buffered
               + 2 * 4 * c_pad         # out f32, double-buffered
               + 2 * d_in              # x bf16 temp
               + 6 * hidden            # h f32 + h bf16
               + 4 * c_pad)            # o f32 temp
    avail = max(vmem_budget - resident, 8 * per_row)
    tm = min(tm_max, max(8, (avail // per_row) // 8 * 8))
    b_rounded = _round_up(B, 8)
    tm = min(tm, b_rounded)
    # Prefer >= 2 batch tiles when B permits so the "parallel" axis splits across the
    # two v7x TensorCores (negligible extra grid-step cost on 1-TC v5e/v6e).
    if tm >= b_rounded and b_rounded >= 16:
        tm = _round_up((b_rounded + 1) // 2, 8)
    return max(tm, 8)


def _build_call(b_pad, tm, d_in, hidden, c_pad, out_dtype, vmem_limit_bytes,
                single_buffer_weights):
    resident_kwargs = {}
    if single_buffer_weights:
        # Constant index_map -> block never changes; one buffer suffices and halves
        # the resident-weight VMEM footprint (matters most under v7x's 64 MiB).
        resident_kwargs = dict(pipeline_mode=pl.Buffered(1))

    in_specs = [
        pl.BlockSpec((tm, d_in), lambda i: (i, 0)),                          # x row tile (f32)
        pl.BlockSpec((d_in, hidden), lambda i: (0, 0), **resident_kwargs),   # w1^T, resident
        pl.BlockSpec((1, hidden), lambda i: (0, 0), **resident_kwargs),      # b1, resident
        pl.BlockSpec((hidden, c_pad), lambda i: (0, 0), **resident_kwargs),  # w2^T (padded), resident
        pl.BlockSpec((1, c_pad), lambda i: (0, 0), **resident_kwargs),       # b2 (padded), resident
    ]
    return pl.pallas_call(
        _mlp_kernel,
        out_shape=jax.ShapeDtypeStruct((b_pad, c_pad), out_dtype),
        grid=(b_pad // tm,),
        in_specs=in_specs,
        out_specs=pl.BlockSpec((tm, c_pad), lambda i: (i, 0)),
        compiler_params=pltpu.CompilerParams(
            dimension_semantics=("parallel",),
            vmem_limit_bytes=vmem_limit_bytes,
        ),
    )


def fully_connected_forward(x_nchw, w1, b1, w2, b2, *, tm_max=512):
    """Forward pass of FullyConnected.

    x_nchw: (B, C, H, W) f32. w1: (hidden, in) f32, b1: (hidden,) f32,
    w2: (classes, hidden) f32, b2: (classes,) f32 (PyTorch layouts).
    Returns (B, classes) f32.
    """
    B = x_nchw.shape[0]
    x2d = x_nchw.reshape(B, -1)                       # flatten(start_dim=1)
    d_in = x2d.shape[1]
    hidden = w1.shape[0]
    num_classes = w2.shape[0]

    # --- parameter prep (one-time / init-time in production) ---
    c_pad = _round_up(num_classes, 128)               # lane-dense output columns
    # Pre-transpose ONCE so both in-kernel dots are plain (M,K)x(K,N).
    w1_t = w1.T.astype(jnp.bfloat16)                                              # (d_in, hidden)
    w2_t = jnp.pad(w2, ((0, c_pad - num_classes), (0, 0))).T.astype(jnp.bfloat16)  # (hidden, c_pad)
    b1_2d = b1.reshape(1, hidden).astype(jnp.float32)
    b2_2d = jnp.pad(b2, (0, c_pad - num_classes)).reshape(1, c_pad).astype(jnp.float32)

    # --- batch tiling from the VMEM budget ---
    phys_vmem = _vmem_capacity_bytes()
    budget = int(phys_vmem * 0.6)                     # headroom for compiler scratch
    tm = _pick_tm(B, d_in, hidden, c_pad, budget, tm_max=tm_max)
    b_pad = _round_up(B, tm)

    x_in = x2d if b_pad == B else jnp.pad(x2d, ((0, b_pad - B), (0, 0)))  # pad only when ragged
    if x_in.dtype != jnp.float32:
        x_in = x_in.astype(jnp.float32)               # kernel casts to bf16 internally

    # Explicit VMEM limit from the footprint (worst case: double-buffered weights).
    resident = 2 * (d_in * hidden + hidden * c_pad) + 4 * (hidden + c_pad)
    streamed = 2 * tm * (4 * d_in + 4 * c_pad)
    temps = tm * (2 * d_in + 6 * hidden + 4 * c_pad)
    footprint = 2 * resident + streamed + temps
    vmem_limit = int(min(phys_vmem, max(32 * 1024 * 1024, 2 * footprint)))

    args = (x_in, w1_t, b1_2d, w2_t, b2_2d)
    try:
        out_padded = _build_call(b_pad, tm, d_in, hidden, c_pad, jnp.float32,
                                 vmem_limit, single_buffer_weights=True)(*args)
    except Exception:
        # Fallback if this JAX build rejects pl.Buffered(1) on the resident blocks.
        out_padded = _build_call(b_pad, tm, d_in, hidden, c_pad, jnp.float32,
                                 vmem_limit, single_buffer_weights=False)(*args)

    if b_pad != B or c_pad != num_classes:
        out_padded = out_padded[:B, :num_classes]
    return out_padded


def _init_linear(key, out_features, in_features):
    # Deterministic PyTorch-like init: U(-1/sqrt(fan_in), 1/sqrt(fan_in))
    kw, kb = jax.random.split(key)
    bound = 1.0 / jnp.sqrt(jnp.float32(in_features))
    w = jax.random.uniform(kw, (out_features, in_features), jnp.float32,
                           minval=-bound, maxval=bound)
    b = jax.random.uniform(kb, (out_features,), jnp.float32,
                           minval=-bound, maxval=bound)
    return w, b


if __name__ == "__main__":
    # Small shapes consistent with the module: flatten NCHW -> Linear -> ReLU -> Linear
    B, C, H, W = 8, 4, 8, 8
    input_size = C * H * W          # 256
    hidden_size = 128
    num_classes = 16

    key = jax.random.PRNGKey(0)
    kx, k1, k2 = jax.random.split(key, 3)

    x = jax.random.normal(kx, (B, C, H, W), jnp.float32)
    w1, b1 = _init_linear(k1, hidden_size, input_size)
    w2, b2 = _init_linear(k2, num_classes, hidden_size)

    out = fully_connected_forward(x, w1, b1, w2, b2)
    out = jax.block_until_ready(out)
    assert out.shape == (B, num_classes)

    # Reference with matching bf16 matmul inputs / f32 accumulation.
    x2d = x.reshape(B, -1)
    ref_h = jnp.maximum(
        jnp.dot(x2d.astype(jnp.bfloat16), w1.T.astype(jnp.bfloat16),
                preferred_element_type=jnp.float32) + b1, 0.0)
    ref = jnp.dot(ref_h.astype(jnp.bfloat16), w2.T.astype(jnp.bfloat16),
                  preferred_element_type=jnp.float32) + b2
    assert jnp.allclose(out, ref, atol=1e-3, rtol=1e-3), \
        f"max abs err {jnp.max(jnp.abs(out - ref))}"

    # Sanity check against the full-f32 PyTorch-equivalent math (bf16 tolerance).
    ref_f32 = jnp.maximum(x2d @ w1.T + b1, 0.0) @ w2.T + b2
    assert jnp.allclose(out, ref_f32, atol=5e-2, rtol=5e-2)

    print("KERNEL_OK")
</pallas_src>

<mosaic_0001>
module attributes {stable_mosaic.version = 11 : i64} {
  func.func @_mlp_kernel(%arg0: i32, %arg1: memref<8x256xf32, #tpu.memory_space<vmem>>, %arg2: memref<256x128xbf16, #tpu.memory_space<vmem>>, %arg3: memref<1x128xf32, #tpu.memory_space<vmem>>, %arg4: memref<128x128xbf16, #tpu.memory_space<vmem>>, %arg5: memref<1x128xf32, #tpu.memory_space<vmem>>, %arg6: memref<8x128xf32, #tpu.memory_space<vmem>>) attributes {dimension_semantics = [#tpu.dimension_semantics<parallel>], iteration_bounds = array<i64: 1>, scalar_prefetch = 0 : i64, scratch_operands = 0 : i64, tpu.core_type = #tpu.core_type<tc>, window_params = [{transform_indices = @transform_0, window_bounds = array<i64: 8, 256>}, {pipeline_mode = #tpu.pipeline_mode<synchronous>, transform_indices = @transform_1, window_bounds = array<i64: 256, 128>}, {pipeline_mode = #tpu.pipeline_mode<synchronous>, transform_indices = @transform_2, window_bounds = array<i64: 1, 128>}, {pipeline_mode = #tpu.pipeline_mode<synchronous>, transform_indices = @transform_3, window_bounds = array<i64: 128, 128>}, {pipeline_mode = #tpu.pipeline_mode<synchronous>, transform_indices = @transform_4, window_bounds = array<i64: 1, 128>}, {transform_indices = @transform_5, window_bounds = array<i64: 8, 128>}]} {
    %c0 = arith.constant 0 : index
    %c0_0 = arith.constant 0 : index
    %0 = vector.load %arg1[%c0, %c0_0] : memref<8x256xf32, #tpu.memory_space<vmem>>, vector<8x256xf32>
    %1 = arith.truncf %0 : vector<8x256xf32> to vector<8x256xbf16>
    %c0_1 = arith.constant 0 : index
    %c0_2 = arith.constant 0 : index
    %2 = vector.load %arg2[%c0_1, %c0_2] : memref<256x128xbf16, #tpu.memory_space<vmem>>, vector<256x128xbf16>
    %cst = arith.constant dense<0.000000e+00> : vector<8x128xf32>
    %3 = tpu.matmul %1, %2, %cst {dimension_numbers = #tpu.dot_dimension_numbers<[1], [0], [0], [1], [0, 0, 1, 1], [], []>} : vector<8x256xbf16>, vector<256x128xbf16>, vector<8x128xf32> -> vector<8x128xf32>
    %c0_3 = arith.constant 0 : index
    %c0_4 = arith.constant 0 : index
    %4 = vector.load %arg3[%c0_3, %c0_4] : memref<1x128xf32, #tpu.memory_space<vmem>>, vector<1x128xf32>
    %5 = vector.broadcast %4 : vector<1x128xf32> to vector<8x128xf32>
    %6 = arith.addf %3, %5 : vector<8x128xf32>
    %cst_5 = arith.constant 0.000000e+00 : f32
    %7 = vector.broadcast %cst_5 : f32 to vector<8x128xf32>
    %8 = arith.maximumf %6, %7 : vector<8x128xf32>
    %9 = arith.truncf %8 : vector<8x128xf32> to vector<8x128xbf16>
    %c0_6 = arith.constant 0 : index
    %c0_7 = arith.constant 0 : index
    %10 = vector.load %arg4[%c0_6, %c0_7] : memref<128x128xbf16, #tpu.memory_space<vmem>>, vector<128x128xbf16>
    %cst_8 = arith.constant dense<0.000000e+00> : vector<8x128xf32>
    %11 = tpu.matmul %9, %10, %cst_8 {dimension_numbers = #tpu.dot_dimension_numbers<[1], [0], [0], [1], [0, 0, 1, 1], [], []>} : vector<8x128xbf16>, vector<128x128xbf16>, vector<8x128xf32> -> vector<8x128xf32>
    %c0_9 = arith.constant 0 : index
    %c0_10 = arith.constant 0 : index
    %12 = vector.load %arg5[%c0_9, %c0_10] : memref<1x128xf32, #tpu.memory_space<vmem>>, vector<1x128xf32>
    %13 = vector.broadcast %12 : vector<1x128xf32> to vector<8x128xf32>
    %14 = arith.addf %11, %13 : vector<8x128xf32>
    %c0_11 = arith.constant 0 : index
    %c0_12 = arith.constant 0 : index
    %15 = vector.load %arg6[%c0_11, %c0_12] : memref<8x128xf32, #tpu.memory_space<vmem>>, vector<8x128xf32>
    tpu.vector_store %arg6[%c0_11, %c0_12], %14 {strides = array<i32>} : memref<8x128xf32, #tpu.memory_space<vmem>>, vector<8x128xf32>,
    return
  }
  func.func @transform_0(%arg0: i32) -> (i32, i32) {
    %c0_i32 = arith.constant 0 : i32
    %c0_i32_0 = arith.constant 0 : i32
    return %arg0, %c0_i32 : i32, i32
  }
  func.func @transform_1(%arg0: i32) -> (i32, i32) {
    %c0_i32 = arith.constant 0 : i32
    %c0_i32_0 = arith.constant 0 : i32
    %c0_i32_1 = arith.constant 0 : i32
    return %c0_i32, %c0_i32_0 : i32, i32
  }
  func.func @transform_2(%arg0: i32) -> (i32, i32) {
    %c0_i32 = arith.constant 0 : i32
    %c0_i32_0 = arith.constant 0 : i32
    %c0_i32_1 = arith.constant 0 : i32
    return %c0_i32, %c0_i32_0 : i32, i32
  }
  func.func @transform_3(%arg0: i32) -> (i32, i32) {
    %c0_i32 = arith.constant 0 : i32
    %c0_i32_0 = arith.constant 0 : i32
    %c0_i32_1 = arith.constant 0 : i32
    return %c0_i32, %c0_i32_0 : i32, i32
  }
  func.func @transform_4(%arg0: i32) -> (i32, i32) {
    %c0_i32 = arith.constant 0 : i32
    %c0_i32_0 = arith.constant 0 : i32
    %c0_i32_1 = arith.constant 0 : i32
    return %c0_i32, %c0_i32_0 : i32, i32
  }
  func.func @transform_5(%arg0: i32) -> (i32, i32) {
    %c0_i32 = arith.constant 0 : i32
    %c0_i32_0 = arith.constant 0 : i32
    return %arg0, %c0_i32 : i32, i32
  }
}

module attributes {stable_mosaic.version = 11 : i64} {
  func.func @_mlp_kernel(%arg0: i32, %arg1: memref<8x256xf32, #tpu.memory_space<vmem>>, %arg2: memref<256x128xbf16, #tpu.memory_space<vmem>>, %arg3: memref<1x128xf32, #tpu.memory_space<vmem>>, %arg4: memref<128x128xbf16, #tpu.memory_space<vmem>>, %arg5: memref<1x128xf32, #tpu.memory_space<vmem>>, %arg6: memref<8x128xf32, #tpu.memory_space<vmem>>) attributes {dimension_semantics = [#tpu.dimension_semantics<parallel>], iteration_bounds = array<i64: 1>, scalar_prefetch = 0 : i64, scratch_operands = 0 : i64, tpu.core_type = #tpu.core_type<tc>, window_params = [{transform_indices = @transform_0, window_bounds = array<i64: 8, 256>}, {pipeline_mode = #tpu.pipeline_mode<synchronous>, transform_indices = @transform_1, window_bounds = array<i64: 256, 128>}, {pipeline_mode = #tpu.pipeline_mode<synchronous>, transform_indices = @transform_2, window_bounds = array<i64: 1, 128>}, {pipeline_mode = #tpu.pipeline_mode<synchronous>, transform_indices = @transform_3, window_bounds = array<i64: 128, 128>}, {pipeline_mode = #tpu.pipeline_mode<synchronous>, transform_indices = @transform_4, window_bounds = array<i64: 1, 128>}, {transform_indices = @transform_5, window_bounds = array<i64: 8, 128>}]} {
    %c0 = arith.constant 0 : index
    %c0_0 = arith.constant 0 : index
    %0 = vector.load %arg1[%c0, %c0_0] : memref<8x256xf32, #tpu.memory_space<vmem>>, vector<8x256xf32>
    %1 = arith.truncf %0 : vector<8x256xf32> to vector<8x256xbf16>
    %c0_1 = arith.constant 0 : index
    %c0_2 = arith.constant 0 : index
    %2 = vector.load %arg2[%c0_1, %c0_2] : memref<256x128xbf16, #tpu.memory_space<vmem>>, vector<256x128xbf16>
    %cst = arith.constant dense<0.000000e+00> : vector<8x128xf32>
    %3 = tpu.matmul %1, %2, %cst {dimension_numbers = #tpu.dot_dimension_numbers<[1], [0], [0], [1], [0, 0, 1, 1], [], []>} : vector<8x256xbf16>, vector<256x128xbf16>, vector<8x128xf32> -> vector<8x128xf32>
    %c0_3 = arith.constant 0 : index
    %c0_4 = arith.constant 0 : index
    %4 = vector.load %arg3[%c0_3, %c0_4] : memref<1x128xf32, #tpu.memory_space<vmem>>, vector<1x128xf32>
    %5 = vector.broadcast %4 : vector<1x128xf32> to vector<8x128xf32>
    %6 = arith.addf %3, %5 : vector<8x128xf32>
    %cst_5 = arith.constant 0.000000e+00 : f32
    %7 = vector.broadcast %cst_5 : f32 to vector<8x128xf32>
    %8 = arith.maximumf %6, %7 : vector<8x128xf32>
    %9 = arith.truncf %8 : vector<8x128xf32> to vector<8x128xbf16>
    %c0_6 = arith.constant 0 : index
    %c0_7 = arith.constant 0 : index
    %10 = vector.load %arg4[%c0_6, %c0_7] : memref<128x128xbf16, #tpu.memory_space<vmem>>, vector<128x128xbf16>
    %cst_8 = arith.constant dense<0.000000e+00> : vector<8x128xf32>
    %11 = tpu.matmul %9, %10, %cst_8 {dimension_numbers = #tpu.dot_dimension_numbers<[1], [0], [0], [1], [0, 0, 1, 1], [], []>} : vector<8x128xbf16>, vector<128x128xbf16>, vector<8x128xf32> -> vector<8x128xf32>
    %c0_9 = arith.constant 0 : index
    %c0_10 = arith.constant 0 : index
    %12 = vector.load %arg5[%c0_9, %c0_10] : memref<1x128xf32, #tpu.memory_space<vmem>>, vector<1x128xf32>
    %13 = vector.broadcast %12 : vector<1x128xf32> to vector<8x128xf32>
    %14 = arith.addf %11, %13 : vector<8x128xf32>
    %c0_11 = arith.constant 0 : index
    %c0_12 = arith.constant 0 : index
    %15 = vector.load %arg6[%c0_11, %c0_12] : memref<8x128xf32, #tpu.memory_space<vmem>>, vector<8x128xf32>
    tpu.vector_store %arg6[%c0_11, %c0_12], %14 {strides = array<i32>} : memref<8x128xf32, #tpu.memory_space<vmem>>, vector<8x128xf32>,
    return
  }
  func.func @transform_0(%arg0: i32) -> (i32, i32) {
    %c0_i32 = arith.constant 0 : i32
    %c0_i32_0 = arith.constant 0 : i32
    return %arg0, %c0_i32 : i32, i32
  }
  func.func @transform_1(%arg0: i32) -> (i32, i32) {
    %c0_i32 = arith.constant 0 : i32
    %c0_i32_0 = arith.constant 0 : i32
    %c0_i32_1 = arith.constant 0 : i32
    return %c0_i32, %c0_i32_0 : i32, i32
  }
  func.func @transform_2(%arg0: i32) -> (i32, i32) {
    %c0_i32 = arith.constant 0 : i32
    %c0_i32_0 = arith.constant 0 : i32
    %c0_i32_1 = arith.constant 0 : i32
    return %c0_i32, %c0_i32_0 : i32, i32
  }
  func.func @transform_3(%arg0: i32) -> (i32, i32) {
    %c0_i32 = arith.constant 0 : i32
    %c0_i32_0 = arith.constant 0 : i32
    %c0_i32_1 = arith.constant 0 : i32
    return %c0_i32, %c0_i32_0 : i32, i32
  }
  func.func @transform_4(%arg0: i32) -> (i32, i32) {
    %c0_i32 = arith.constant 0 : i32
    %c0_i32_0 = arith.constant 0 : i32
    %c0_i32_1 = arith.constant 0 : i32
    return %c0_i32, %c0_i32_0 : i32, i32
  }
  func.func @transform_5(%arg0: i32) -> (i32, i32) {
    %c0_i32 = arith.constant 0 : i32
    %c0_i32_0 = arith.constant 0 : i32
    return %arg0, %c0_i32 : i32, i32
  }
}

</mosaic_0001>

<llo_original>
// kernel: tpu_custom_call.1
$region0: #{tpu_custom_call.1}
  #allocation0 [shape = 'u32[]', space=smem, size = 0x4, offset = 0x4, fixed_abs, tag = 'smem constant byte address 0x4 - core index']
  #allocation1 [shape = 'u32[72,128]{1,0:T(1,128)}', space=vmem, size = 0x9000, scoped, tag = 'internal scratch']
  %s0 = inlined_call_operand.hbm [shape: f32[8,256], index: 0, kind: input, shape index: {}]
  %s1 = inlined_call_operand.hbm [shape: bf16[256,128], index: 1, kind: input, shape index: {}]
  %s2 = inlined_call_operand.vmem [shape: f32[1,128], index: 2, kind: input, shape index: {}]
  %s3 = inlined_call_operand.hbm [shape: bf16[128,128], index: 3, kind: input, shape index: {}]
  %s4 = inlined_call_operand.vmem [shape: f32[1,128], index: 4, kind: input, shape index: {}]
  %s5 = inlined_call_operand.hbm [shape: f32[8,128], index: 5, kind: output, shape index: {}]
  %s6 = sld [smem:[#allocation0]]
  $region42: #{tpu_custom_call.1} parent=0
    _
  %s8 = ssub.s32 1, %s6
  %s9 = scalar_select 0, %s8, %s6
  $region1: #{tpu_custom_call.1} parent=0
    #allocation2 [shape = 'u8[8192]{0}', space=vmem, size = 0x2000, scoped, tag = 'input window, operand 0, single buffered']
    #allocation3 [shape = 's32[1]{0}', space=sflag, size = 0x4, scoped, tag = 'scoped memory for tpu_custom_call.1']
    #allocation4 [shape = 's32[1]{0}', space=sflag, size = 0x4, scoped, tag = 'scoped memory for tpu_custom_call.1']
    #allocation5 [shape = 'u8[65536]{0}', space=vmem, size = 0x10000, scoped, tag = 'input window, operand 1, single buffered']
    #allocation6 [shape = 's32[1]{0}', space=sflag, size = 0x4, scoped, tag = 'scoped memory for tpu_custom_call.1']
    #allocation7 [shape = 'u8[32768]{0}', space=vmem, size = 0x8000, scoped, tag = 'input window, operand 3, single buffered']
    #allocation8 [shape = 'u8[4096]{0}', space=vmem, size = 0x1000, scoped, tag = 'output window, operand 0, single buffered']
    %10 = vsyncpa [#allocation3], 0
    %11 = vsyncpa [#allocation6], 0
    %12 = vsyncpa [#allocation4], 0
    // Predicated region
    $region2: #{tpu_custom_call.1} parent=1 // pred_check
      _
    $region3: #{tpu_custom_call.1} parent=1 // pred_check_branch
      %14 = sbr.rel (0) target = $region5
    $region4: #{tpu_custom_call.1} parent=1 // pred_region
      %16 = vsyncadd [#allocation3], 0
      %s18 = sshll.u32 %s0, 4
      %s19 = int_to_ptr.hbm [resolvable:$true] %s18
      %s20 = sshll.u32 [#allocation2], 4
      %s21 = int_to_ptr.vmem [resolvable:$true] %s20
      %23 = dma.hbm_to_vmem [thread:$0]  %s19, 256, %s21, [#allocation3]
    $region5: #{tpu_custom_call.1} parent=1 // pred_fallthru
      _
    // Predicated region
    $region6: #{tpu_custom_call.1} parent=1 // pred_check
      _
    $region7: #{tpu_custom_call.1} parent=1 // pred_check_branch
      %25 = sbr.rel (0) target = $region9
    $region8: #{tpu_custom_call.1} parent=1 // pred_region
      %27 = vsyncadd [#allocation6], 0
      %s28 = sshll.u32 %s1, 4
      %s29 = int_to_ptr.hbm [resolvable:$true] %s28
      %s30 = sshll.u32 [#allocation5], 4
      %s31 = int_to_ptr.vmem [resolvable:$true] %s30
      %36 = dma.hbm_to_vmem [thread:$0]  %s29, 2048, %s31, [#allocation6], 64, 64, 4
    $region9: #{tpu_custom_call.1} parent=1 // pred_fallthru
      _
    // Predicated region
    $region10: #{tpu_custom_call.1} parent=1 // pred_check
      _
    $region11: #{tpu_custom_call.1} parent=1 // pred_check_branch
      %38 = sbr.rel (0) target = $region13
    $region12: #{tpu_custom_call.1} parent=1 // pred_region
      _
    $region13: #{tpu_custom_call.1} parent=1 // pred_fallthru
      _
    // Predicated region
    $region14: #{tpu_custom_call.1} parent=1 // pred_check
      _
    $region15: #{tpu_custom_call.1} parent=1 // pred_check_branch
      %40 = sbr.rel (0) target = $region17
    $region16: #{tpu_custom_call.1} parent=1 // pred_region
      %42 = vsyncadd [#allocation6], 0
      %s43 = sshll.u32 %s3, 4
      %s44 = int_to_ptr.hbm [resolvable:$true] %s43
      %s45 = sshll.u32 [#allocation7], 4
      %s46 = int_to_ptr.vmem [resolvable:$true] %s45
      %51 = dma.hbm_to_vmem [thread:$0]  %s44, 1024, %s46, [#allocation6], 64, 64, 4
    $region17: #{tpu_custom_call.1} parent=1 // pred_fallthru
      _
    // Predicated region
    $region18: #{tpu_custom_call.1} parent=1 // pred_check
      _
    $region19: #{tpu_custom_call.1} parent=1 // pred_check_branch
      %53 = sbr.rel (0) target = $region21
    $region20: #{tpu_custom_call.1} parent=1 // pred_region
      _
    $region21: #{tpu_custom_call.1} parent=1 // pred_fallthru
      _
    // Predicated region
    $region22: #{tpu_custom_call.1} parent=1 // pred_check
      _
    $region23: #{tpu_custom_call.1} parent=1 // pred_check_branch
      %55 = sbr.rel (0) target = $region25
    $region24: #{tpu_custom_call.1} parent=1 // pred_region
      %57 = dma.done [#allocation3], 256
    $region25: #{tpu_custom_call.1} parent=1 // pred_fallthru
      _
    // Predicated region
    $region26: #{tpu_custom_call.1} parent=1 // pred_check
      _
    $region27: #{tpu_custom_call.1} parent=1 // pred_check_branch
      %59 = sbr.rel (0) target = $region29
    $region28: #{tpu_custom_call.1} parent=1 // pred_region
      %61 = dma.done [#allocation6], 2048
    $region29: #{tpu_custom_call.1} parent=1 // pred_fallthru
      _
    // Predicated region
    $region30: #{tpu_custom_call.1} parent=1 // pred_check
      _
    $region31: #{tpu_custom_call.1} parent=1 // pred_check_branch
      %63 = sbr.rel (0) target = $region33
    $region32: #{tpu_custom_call.1} parent=1 // pred_region
      %65 = dma.done [#allocation6], 1024
    $region33: #{tpu_custom_call.1} parent=1 // pred_fallthru
      _
    %v66 = vld [vmem:[#allocation2] sm:$0xff]
    %v67 = vld [vmem:[#allocation2 + $0x8] sm:$0xff]
    %v68 = vpack.c.bf16 %v66, %v66
    %v69 = vpack.c.bf16 %v67, %v67
    %v70 = vld [vmem:[#allocation5] sm:$0xf]
    %v71 = vld [vmem:[#allocation5 + $0x4] sm:$0xf]
    %v72 = vld [vmem:[#allocation5 + $0x8] sm:$0xf]
    %v73 = vld [vmem:[#allocation5 + $0xc] sm:$0xf]
    %v74 = vld [vmem:[#allocation5 + $0x10] sm:$0xf]
    %v75 = vld [vmem:[#allocation5 + $0x14] sm:$0xf]
    %v76 = vld [vmem:[#allocation5 + $0x18] sm:$0xf]
    %v77 = vld [vmem:[#allocation5 + $0x1c] sm:$0xf]
    %v78 = vld [vmem:[#allocation5 + $0x20] sm:$0xf]
    %v79 = vld [vmem:[#allocation5 + $0x24] sm:$0xf]
    %v80 = vld [vmem:[#allocation5 + $0x28] sm:$0xf]
    %v81 = vld [vmem:[#allocation5 + $0x2c] sm:$0xf]
    %v82 = vld [vmem:[#allocation5 + $0x30] sm:$0xf]
    %v83 = vld [vmem:[#allocation5 + $0x34] sm:$0xf]
    %v84 = vld [vmem:[#allocation5 + $0x38] sm:$0xf]
    %v85 = vld [vmem:[#allocation5 + $0x3c] sm:$0xf]
    %v86 = vld [vmem:[#allocation5 + $0x40] sm:$0xf]
    %v87 = vld [vmem:[#allocation5 + $0x44] sm:$0xf]
    %v88 = vld [vmem:[#allocation5 + $0x48] sm:$0xf]
    %v89 = vld [vmem:[#allocation5 + $0x4c] sm:$0xf]
    %v90 = vld [vmem:[#allocation5 + $0x50] sm:$0xf]
    %v91 = vld [vmem:[#allocation5 + $0x54] sm:$0xf]
    %v92 = vld [vmem:[#allocation5 + $0x58] sm:$0xf]
    %v93 = vld [vmem:[#allocation5 + $0x5c] sm:$0xf]
    %v94 = vld [vmem:[#allocation5 + $0x60] sm:$0xf]
    %v95 = vld [vmem:[#allocation5 + $0x64] sm:$0xf]
    %v96 = vld [vmem:[#allocation5 + $0x68] sm:$0xf]
    %v97 = vld [vmem:[#allocation5 + $0x6c] sm:$0xf]
    %v98 = vld [vmem:[#allocation5 + $0x70] sm:$0xf]
    %v99 = vld [vmem:[#allocation5 + $0x74] sm:$0xf]
    %v100 = vld [vmem:[#allocation5 + $0x78] sm:$0xf]
    %v101 = vld [vmem:[#allocation5 + $0x7c] sm:$0xf]
    %v102 = vld [vmem:[%s2] sm:$0x1]
    %v104 = vperm.slane %v102, 0
    %v138 = vunpack.c.l.b16 %v70
    %v139 = vunpack.c.l.b16 %v71
    %v140 = vunpack.c.l.b16 %v72
    %v141 = vunpack.c.l.b16 %v73
    %v142 = vunpack.c.l.b16 %v74
    %v143 = vunpack.c.l.b16 %v75
    %v144 = vunpack.c.l.b16 %v76
    %v145 = vunpack.c.l.b16 %v77
    %v146 = vunpack.c.l.b16 %v78
    %v147 = vunpack.c.l.b16 %v79
    %v148 = vunpack.c.l.b16 %v80
    %v149 = vunpack.c.l.b16 %v81
    %v150 = vunpack.c.l.b16 %v82
    %v151 = vunpack.c.l.b16 %v83
    %v152 = vunpack.c.l.b16 %v84
    %v153 = vunpack.c.l.b16 %v85
    %v154 = vunpack.c.l.b16 %v86
    %v155 = vunpack.c.l.b16 %v87
    %v156 = vunpack.c.l.b16 %v88
    %v157 = vunpack.c.l.b16 %v89
    %v158 = vunpack.c.l.b16 %v90
    %v159 = vunpack.c.l.b16 %v91
    %v160 = vunpack.c.l.b16 %v92
    %v161 = vunpack.c.l.b16 %v93
    %v162 = vunpack.c.l.b16 %v94
    %v163 = vunpack.c.l.b16 %v95
    %v164 = vunpack.c.l.b16 %v96
    %v165 = vunpack.c.l.b16 %v97
    %v166 = vunpack.c.l.b16 %v98
    %v167 = vunpack.c.l.b16 %v99
    %v168 = vunpack.c.l.b16 %v100
    %v169 = vunpack.c.l.b16 %v101
    %v170 = vpack.c.b16 %v139, %v138
    %v171 = vpack.c.b16 %v141, %v140
    %v172 = vpack.c.b16 %v143, %v142
    %v173 = vpack.c.b16 %v145, %v144
    %v174 = vpack.c.b16 %v147, %v146
    %v175 = vpack.c.b16 %v149, %v148
    %v176 = vpack.c.b16 %v151, %v150
    %v177 = vpack.c.b16 %v153, %v152
    %v178 = vpack.c.b16 %v155, %v154
    %v179 = vpack.c.b16 %v157, %v156
    %v180 = vpack.c.b16 %v159, %v158
    %v181 = vpack.c.b16 %v161, %v160
    %v182 = vpack.c.b16 %v163, %v162
    %v183 = vpack.c.b16 %v165, %v164
    %v184 = vpack.c.b16 %v167, %v166
    %v185 = vpack.c.b16 %v169, %v168
    %202 = vmatpush.bf16.msra.mxu0 %v177
    %203 = vmatpush.bf16.msra.mxu0 %v176
    %204 = vmatpush.bf16.msra.mxu0 %v175
    %205 = vmatpush.bf16.msra.mxu0 %v174
    %206 = vmatpush.bf16.msra.mxu0 %v173
    %207 = vmatpush.bf16.msra.mxu0 %v172
    %208 = vmatpush.bf16.msra.mxu0 %v171
    %209 = vmatpush.bf16.msra.mxu0 %v170
    %210 = vmatmul.bf16.gmra.mxu0 %v68
    %v211 = vpop.f32.mrf.mxu0
    %v212 = vadd.f32 %v104, %v211
    %v213 = vpop.f32.mrf.mxu0
    %214 = vdwg.mxu0
    %215 = vmatpush.bf16.msra.mxu0 %v185
    %216 = vmatpush.bf16.msra.mxu0 %v184
    %217 = vmatpush.bf16.msra.mxu0 %v183
    %218 = vmatpush.bf16.msra.mxu0 %v182
    %219 = vmatpush.bf16.msra.mxu0 %v181
    %220 = vmatpush.bf16.msra.mxu0 %v180
    %221 = vmatpush.bf16.msra.mxu0 %v179
    %222 = vmatpush.bf16.msra.mxu0 %v178
    %223 = vmatmul.bf16.gmra.mxu0 %v69
    %v224 = vpop.f32.mrf.mxu0
    %v225 = vadd.f32 %v212, %v224
    %v226 = vpop.f32.mrf.mxu0
    %227 = vdwg.mxu0
    %v228 = vmax.f32 %v225, 0.0
    %v229 = vpack.c.bf16 %v228, %v228
    %v230 = vld [vmem:[#allocation7] sm:$0xf]
    %v231 = vld [vmem:[#allocation7 + $0x4] sm:$0xf]
    %v232 = vld [vmem:[#allocation7 + $0x8] sm:$0xf]
    %v233 = vld [vmem:[#allocation7 + $0xc] sm:$0xf]
    %v234 = vld [vmem:[#allocation7 + $0x10] sm:$0xf]
    %v235 = vld [vmem:[#allocation7 + $0x14] sm:$0xf]
    %v236 = vld [vmem:[#allocation7 + $0x18] sm:$0xf]
    %v237 = vld [vmem:[#allocation7 + $0x1c] sm:$0xf]
    %v238 = vld [vmem:[#allocation7 + $0x20] sm:$0xf]
    %v239 = vld [vmem:[#allocation7 + $0x24] sm:$0xf]
    %v240 = vld [vmem:[#allocation7 + $0x28] sm:$0xf]
    %v241 = vld [vmem:[#allocation7 + $0x2c] sm:$0xf]
    %v242 = vld [vmem:[#allocation7 + $0x30] sm:$0xf]
    %v243 = vld [vmem:[#allocation7 + $0x34] sm:$0xf]
    %v244 = vld [vmem:[#allocation7 + $0x38] sm:$0xf]
    %v245 = vld [vmem:[#allocation7 + $0x3c] sm:$0xf]
    %v246 = vld [vmem:[%s4] sm:$0x1]
    %v248 = vperm.slane %v246, 0
    %v266 = vunpack.c.l.b16 %v230
    %v267 = vunpack.c.l.b16 %v231
    %v268 = vunpack.c.l.b16 %v232
    %v269 = vunpack.c.l.b16 %v233
    %v270 = vunpack.c.l.b16 %v234
    %v271 = vunpack.c.l.b16 %v235
    %v272 = vunpack.c.l.b16 %v236
    %v273 = vunpack.c.l.b16 %v237
    %v274 = vunpack.c.l.b16 %v238
    %v275 = vunpack.c.l.b16 %v239
    %v276 = vunpack.c.l.b16 %v240
    %v277 = vunpack.c.l.b16 %v241
    %v278 = vunpack.c.l.b16 %v242
    %v279 = vunpack.c.l.b16 %v243
    %v280 = vunpack.c.l.b16 %v244
    %v281 = vunpack.c.l.b16 %v245
    %v282 = vpack.c.b16 %v267, %v266
    %v283 = vpack.c.b16 %v269, %v268
    %v284 = vpack.c.b16 %v271, %v270
    %v285 = vpack.c.b16 %v273, %v272
    %v286 = vpack.c.b16 %v275, %v274
    %v287 = vpack.c.b16 %v277, %v276
    %v288 = vpack.c.b16 %v279, %v278
    %v289 = vpack.c.b16 %v281, %v280
    %298 = vmatpush.bf16.msra.mxu0 %v289
    %299 = vmatpush.bf16.msra.mxu0 %v288
    %300 = vmatpush.bf16.msra.mxu0 %v287
    %301 = vmatpush.bf16.msra.mxu0 %v286
    %302 = vmatpush.bf16.msra.mxu0 %v285
    %303 = vmatpush.bf16.msra.mxu0 %v284
    %304 = vmatpush.bf16.msra.mxu0 %v283
    %305 = vmatpush.bf16.msra.mxu0 %v282
    %306 = vmatmul.bf16.gmra.mxu0 %v229
    %v307 = vpop.f32.mrf.mxu0
    %v308 = vadd.f32 %v248, %v307
    %v309 = vpop.f32.mrf.mxu0
    %310 = vdwg.mxu0
    %311 = vst [vmem:[#allocation8] sm:$0xff] %v308
    // Predicated region
    $region34: #{tpu_custom_call.1} parent=1 // pred_check
      _
    $region35: #{tpu_custom_call.1} parent=1 // pred_check_branch
      %313 = sbr.rel (0) target = $region37
    $region36: #{tpu_custom_call.1} parent=1 // pred_region
      %315 = vsyncadd [#allocation4], 0
      %s317 = sshll.u32 [#allocation8], 4
      %s318 = int_to_ptr.vmem [resolvable:$true] %s317
      %s319 = sshll.u32 %s5, 4
      %s320 = int_to_ptr.hbm [resolvable:$true] %s319
      %322 = dma.vmem_to_hbm [thread:$0]  %s318, 128, %s320, [#allocation4]
    $region37: #{tpu_custom_call.1} parent=1 // pred_fallthru
      _
    // Predicated region
    $region38: #{tpu_custom_call.1} parent=1 // pred_check
      _
    $region39: #{tpu_custom_call.1} parent=1 // pred_check_branch
      %324 = sbr.rel (0) target = $region41
    $region40: #{tpu_custom_call.1} parent=1 // pred_region
      %326 = dma.done [#allocation4], 128
    $region41: #{tpu_custom_call.1} parent=1 // pred_fallthru
      _
    %327 = vsyncpa [#allocation3], 1
    %328 = vsyncpa [#allocation6], 1
    %329 = vsyncpa [#allocation4], 1

// kernel: tpu_custom_call.1
$region0: #{tpu_custom_call.1}
  #allocation0 [shape = 'u32[]', space=smem, size = 0x4, offset = 0x4, fixed_abs, tag = 'smem constant byte address 0x4 - core index']
  #allocation1 [shape = 'u32[72,128]{1,0:T(1,128)}', space=vmem, size = 0x9000, scoped, tag = 'internal scratch']
  %s0 = inlined_call_operand.hbm [shape: f32[8,256], index: 0, kind: input, shape index: {}]
  %s1 = inlined_call_operand.hbm [shape: bf16[256,128], index: 1, kind: input, shape index: {}]
  %s2 = inlined_call_operand.vmem [shape: f32[1,128], index: 2, kind: input, shape index: {}]
  %s3 = inlined_call_operand.hbm [shape: bf16[128,128], index: 3, kind: input, shape index: {}]
  %s4 = inlined_call_operand.vmem [shape: f32[1,128], index: 4, kind: input, shape index: {}]
  %s5 = inlined_call_operand.hbm [shape: f32[8,128], index: 5, kind: output, shape index: {}]
  %s6 = sld [smem:[#allocation0]]
  $region42: #{tpu_custom_call.1} parent=0
    _
  %s8 = ssub.s32 1, %s6
  %s9 = scalar_select 0, %s8, %s6
  $region1: #{tpu_custom_call.1} parent=0
    #allocation2 [shape = 'u8[8192]{0}', space=vmem, size = 0x2000, scoped, tag = 'input window, operand 0, single buffered']
    #allocation3 [shape = 's32[1]{0}', space=sflag, size = 0x4, scoped, tag = 'scoped memory for tpu_custom_call.1']
    #allocation4 [shape = 's32[1]{0}', space=sflag, size = 0x4, scoped, tag = 'scoped memory for tpu_custom_call.1']
    #allocation5 [shape = 'u8[65536]{0}', space=vmem, size = 0x10000, scoped, tag = 'input window, operand 1, single buffered']
    #allocation6 [shape = 's32[1]{0}', space=sflag, size = 0x4, scoped, tag = 'scoped memory for tpu_custom_call.1']
    #allocation7 [shape = 'u8[32768]{0}', space=vmem, size = 0x8000, scoped, tag = 'input window, operand 3, single buffered']
    #allocation8 [shape = 'u8[4096]{0}', space=vmem, size = 0x1000, scoped, tag = 'output window, operand 0, single buffered']
    %10 = vsyncpa [#allocation3], 0
    %11 = vsyncpa [#allocation6], 0
    %12 = vsyncpa [#allocation4], 0
    // Predicated region
    $region2: #{tpu_custom_call.1} parent=1 // pred_check
      _
    $region3: #{tpu_custom_call.1} parent=1 // pred_check_branch
      %14 = sbr.rel (0) target = $region5
    $region4: #{tpu_custom_call.1} parent=1 // pred_region
      %16 = vsyncadd [#allocation3], 0
      %s18 = sshll.u32 %s0, 4
      %s19 = int_to_ptr.hbm [resolvable:$true] %s18
      %s20 = sshll.u32 [#allocation2], 4
      %s21 = int_to_ptr.vmem [resolvable:$true] %s20
      %23 = dma.hbm_to_vmem [thread:$0]  %s19, 256, %s21, [#allocation3]
    $region5: #{tpu_custom_call.1} parent=1 // pred_fallthru
      _
    // Predicated region
    $region6: #{tpu_custom_call.1} parent=1 // pred_check
      _
    $region7: #{tpu_custom_call.1} parent=1 // pred_check_branch
      %25 = sbr.rel (0) target = $region9
    $region8: #{tpu_custom_call.1} parent=1 // pred_region
      %27 = vsyncadd [#allocation6], 0
      %s28 = sshll.u32 %s1, 4
      %s29 = int_to_ptr.hbm [resolvable:$true] %s28
      %s30 = sshll.u32 [#allocation5], 4
      %s31 = int_to_ptr.vmem [resolvable:$true] %s30
      %36 = dma.hbm_to_vmem [thread:$0]  %s29, 2048, %s31, [#allocation6], 64, 64, 4
    $region9: #{tpu_custom_call.1} parent=1 // pred_fallthru
      _
    // Predicated region
    $region10: #{tpu_custom_call.1} parent=1 // pred_check
      _
    $region11: #{tpu_custom_call.1} parent=1 // pred_check_branch
      %38 = sbr.rel (0) target = $region13
    $region12: #{tpu_custom_call.1} parent=1 // pred_region
      _
    $region13: #{tpu_custom_call.1} parent=1 // pred_fallthru
      _
    // Predicated region
    $region14: #{tpu_custom_call.1} parent=1 // pred_check
      _
    $region15: #{tpu_custom_call.1} parent=1 // pred_check_branch
      %40 = sbr.rel (0) target = $region17
    $region16: #{tpu_custom_call.1} parent=1 // pred_region
      %42 = vsyncadd [#allocation6], 0
      %s43 = sshll.u32 %s3, 4
      %s44 = int_to_ptr.hbm [resolvable:$true] %s43
      %s45 = sshll.u32 [#allocation7], 4
      %s46 = int_to_ptr.vmem [resolvable:$true] %s45
      %51 = dma.hbm_to_vmem [thread:$0]  %s44, 1024, %s46, [#allocation6], 64, 64, 4
    $region17: #{tpu_custom_call.1} parent=1 // pred_fallthru
      _
    // Predicated region
    $region18: #{tpu_custom_call.1} parent=1 // pred_check
      _
    $region19: #{tpu_custom_call.1} parent=1 // pred_check_branch
      %53 = sbr.rel (0) target = $region21
    $region20: #{tpu_custom_call.1} parent=1 // pred_region
      _
    $region21: #{tpu_custom_call.1} parent=1 // pred_fallthru
      _
    // Predicated region
    $region22: #{tpu_custom_call.1} parent=1 // pred_check
      _
    $region23: #{tpu_custom_call.1} parent=1 // pred_check_branch
      %55 = sbr.rel (0) target = $region25
    $region24: #{tpu_custom_call.1} parent=1 // pred_region
      %57 = dma.done [#allocation3], 256
    $region25: #{tpu_custom_call.1} parent=1 // pred_fallthru
      _
    // Predicated region
    $region26: #{tpu_custom_call.1} parent=1 // pred_check
      _
    $region27: #{tpu_custom_call.1} parent=1 // pred_check_branch
      %59 = sbr.rel (0) target = $region29
    $region28: #{tpu_custom_call.1} parent=1 // pred_region
      %61 = dma.done [#allocation6], 2048
    $region29: #{tpu_custom_call.1} parent=1 // pred_fallthru
      _
    // Predicated region
    $region30: #{tpu_custom_call.1} parent=1 // pred_check
      _
    $region31: #{tpu_custom_call.1} parent=1 // pred_check_branch
      %63 = sbr.rel (0) target = $region33
    $region32: #{tpu_custom_call.1} parent=1 // pred_region
      %65 = dma.done [#allocation6], 1024
    $region33: #{tpu_custom_call.1} parent=1 // pred_fallthru
      _
    %v66 = vld [vmem:[#allocation2] sm:$0xff]
    %v67 = vld [vmem:[#allocation2 + $0x8] sm:$0xff]
    %v68 = vpack.c.bf16 %v66, %v66
    %v69 = vpack.c.bf16 %v67, %v67
    %v70 = vld [vmem:[#allocation5] sm:$0xf]
    %v71 = vld [vmem:[#allocation5 + $0x4] sm:$0xf]
    %v72 = vld [vmem:[#allocation5 + $0x8] sm:$0xf]
    %v73 = vld [vmem:[#allocation5 + $0xc] sm:$0xf]
    %v74 = vld [vmem:[#allocation5 + $0x10] sm:$0xf]
    %v75 = vld [vmem:[#allocation5 + $0x14] sm:$0xf]
    %v76 = vld [vmem:[#allocation5 + $0x18] sm:$0xf]
    %v77 = vld [vmem:[#allocation5 + $0x1c] sm:$0xf]
    %v78 = vld [vmem:[#allocation5 + $0x20] sm:$0xf]
    %v79 = vld [vmem:[#allocation5 + $0x24] sm:$0xf]
    %v80 = vld [vmem:[#allocation5 + $0x28] sm:$0xf]
    %v81 = vld [vmem:[#allocation5 + $0x2c] sm:$0xf]
    %v82 = vld [vmem:[#allocation5 + $0x30] sm:$0xf]
    %v83 = vld [vmem:[#allocation5 + $0x34] sm:$0xf]
    %v84 = vld [vmem:[#allocation5 + $0x38] sm:$0xf]
    %v85 = vld [vmem:[#allocation5 + $0x3c] sm:$0xf]
    %v86 = vld [vmem:[#allocation5 + $0x40] sm:$0xf]
    %v87 = vld [vmem:[#allocation5 + $0x44] sm:$0xf]
    %v88 = vld [vmem:[#allocation5 + $0x48] sm:$0xf]
    %v89 = vld [vmem:[#allocation5 + $0x4c] sm:$0xf]
    %v90 = vld [vmem:[#allocation5 + $0x50] sm:$0xf]
    %v91 = vld [vmem:[#allocation5 + $0x54] sm:$0xf]
    %v92 = vld [vmem:[#allocation5 + $0x58] sm:$0xf]
    %v93 = vld [vmem:[#allocation5 + $0x5c] sm:$0xf]
    %v94 = vld [vmem:[#allocation5 + $0x60] sm:$0xf]
    %v95 = vld [vmem:[#allocation5 + $0x64] sm:$0xf]
    %v96 = vld [vmem:[#allocation5 + $0x68] sm:$0xf]
    %v97 = vld [vmem:[#allocation5 + $0x6c] sm:$0xf]
    %v98 = vld [vmem:[#allocation5 + $0x70] sm:$0xf]
    %v99 = vld [vmem:[#allocation5 + $0x74] sm:$0xf]
    %v100 = vld [vmem:[#allocation5 + $0x78] sm:$0xf]
    %v101 = vld [vmem:[#allocation5 + $0x7c] sm:$0xf]
    %v102 = vld [vmem:[%s2] sm:$0x1]
    %v104 = vperm.slane %v102, 0
    %v138 = vunpack.c.l.b16 %v70
    %v139 = vunpack.c.l.b16 %v71
    %v140 = vunpack.c.l.b16 %v72
    %v141 = vunpack.c.l.b16 %v73
    %v142 = vunpack.c.l.b16 %v74
    %v143 = vunpack.c.l.b16 %v75
    %v144 = vunpack.c.l.b16 %v76
    %v145 = vunpack.c.l.b16 %v77
    %v146 = vunpack.c.l.b16 %v78
    %v147 = vunpack.c.l.b16 %v79
    %v148 = vunpack.c.l.b16 %v80
    %v149 = vunpack.c.l.b16 %v81
    %v150 = vunpack.c.l.b16 %v82
    %v151 = vunpack.c.l.b16 %v83
    %v152 = vunpack.c.l.b16 %v84
    %v153 = vunpack.c.l.b16 %v85
    %v154 = vunpack.c.l.b16 %v86
    %v155 = vunpack.c.l.b16 %v87
    %v156 = vunpack.c.l.b16 %v88
    %v157 = vunpack.c.l.b16 %v89
    %v158 = vunpack.c.l.b16 %v90
    %v159 = vunpack.c.l.b16 %v91
    %v160 = vunpack.c.l.b16 %v92
    %v161 = vunpack.c.l.b16 %v93
    %v162 = vunpack.c.l.b16 %v94
    %v163 = vunpack.c.l.b16 %v95
    %v164 = vunpack.c.l.b16 %v96
    %v165 = vunpack.c.l.b16 %v97
    %v166 = vunpack.c.l.b16 %v98
    %v167 = vunpack.c.l.b16 %v99
    %v168 = vunpack.c.l.b16 %v100
    %v169 = vunpack.c.l.b16 %v101
    %v170 = vpack.c.b16 %v139, %v138
    %v171 = vpack.c.b16 %v141, %v140
    %v172 = vpack.c.b16 %v143, %v142
    %v173 = vpack.c.b16 %v145, %v144
    %v174 = vpack.c.b16 %v147, %v146
    %v175 = vpack.c.b16 %v149, %v148
    %v176 = vpack.c.b16 %v151, %v150
    %v177 = vpack.c.b16 %v153, %v152
    %v178 = vpack.c.b16 %v155, %v154
    %v179 = vpack.c.b16 %v157, %v156
    %v180 = vpack.c.b16 %v159, %v158
    %v181 = vpack.c.b16 %v161, %v160
    %v182 = vpack.c.b16 %v163, %v162
    %v183 = vpack.c.b16 %v165, %v164
    %v184 = vpack.c.b16 %v167, %v166
    %v185 = vpack.c.b16 %v169, %v168
    %202 = vmatpush.bf16.msra.mxu0 %v177
    %203 = vmatpush.bf16.msra.mxu0 %v176
    %204 = vmatpush.bf16.msra.mxu0 %v175
    %205 = vmatpush.bf16.msra.mxu0 %v174
    %206 = vmatpush.bf16.msra.mxu0 %v173
    %207 = vmatpush.bf16.msra.mxu0 %v172
    %208 = vmatpush.bf16.msra.mxu0 %v171
    %209 = vmatpush.bf16.msra.mxu0 %v170
    %210 = vmatmul.bf16.gmra.mxu0 %v68
    %v211 = vpop.f32.mrf.mxu0
    %v212 = vadd.f32 %v104, %v211
    %v213 = vpop.f32.mrf.mxu0
    %214 = vdwg.mxu0
    %215 = vmatpush.bf16.msra.mxu0 %v185
    %216 = vmatpush.bf16.msra.mxu0 %v184
    %217 = vmatpush.bf16.msra.mxu0 %v183
    %218 = vmatpush.bf16.msra.mxu0 %v182
    %219 = vmatpush.bf16.msra.mxu0 %v181
    %220 = vmatpush.bf16.msra.mxu0 %v180
    %221 = vmatpush.bf16.msra.mxu0 %v179
    %222 = vmatpush.bf16.msra.mxu0 %v178
    %223 = vmatmul.bf16.gmra.mxu0 %v69
    %v224 = vpop.f32.mrf.mxu0
    %v225 = vadd.f32 %v212, %v224
    %v226 = vpop.f32.mrf.mxu0
    %227 = vdwg.mxu0
    %v228 = vmax.f32 %v225, 0.0
    %v229 = vpack.c.bf16 %v228, %v228
    %v230 = vld [vmem:[#allocation7] sm:$0xf]
    %v231 = vld [vmem:[#allocation7 + $0x4] sm:$0xf]
    %v232 = vld [vmem:[#allocation7 + $0x8] sm:$0xf]
    %v233 = vld [vmem:[#allocation7 + $0xc] sm:$0xf]
    %v234 = vld [vmem:[#allocation7 + $0x10] sm:$0xf]
    %v235 = vld [vmem:[#allocation7 + $0x14] sm:$0xf]
    %v236 = vld [vmem:[#allocation7 + $0x18] sm:$0xf]
    %v237 = vld [vmem:[#allocation7 + $0x1c] sm:$0xf]
    %v238 = vld [vmem:[#allocation7 + $0x20] sm:$0xf]
    %v239 = vld [vmem:[#allocation7 + $0x24] sm:$0xf]
    %v240 = vld [vmem:[#allocation7 + $0x28] sm:$0xf]
    %v241 = vld [vmem:[#allocation7 + $0x2c] sm:$0xf]
    %v242 = vld [vmem:[#allocation7 + $0x30] sm:$0xf]
    %v243 = vld [vmem:[#allocation7 + $0x34] sm:$0xf]
    %v244 = vld [vmem:[#allocation7 + $0x38] sm:$0xf]
    %v245 = vld [vmem:[#allocation7 + $0x3c] sm:$0xf]
    %v246 = vld [vmem:[%s4] sm:$0x1]
    %v248 = vperm.slane %v246, 0
    %v266 = vunpack.c.l.b16 %v230
    %v267 = vunpack.c.l.b16 %v231
    %v268 = vunpack.c.l.b16 %v232
    %v269 = vunpack.c.l.b16 %v233
    %v270 = vunpack.c.l.b16 %v234
    %v271 = vunpack.c.l.b16 %v235
    %v272 = vunpack.c.l.b16 %v236
    %v273 = vunpack.c.l.b16 %v237
    %v274 = vunpack.c.l.b16 %v238
    %v275 = vunpack.c.l.b16 %v239
    %v276 = vunpack.c.l.b16 %v240
    %v277 = vunpack.c.l.b16 %v241
    %v278 = vunpack.c.l.b16 %v242
    %v279 = vunpack.c.l.b16 %v243
    %v280 = vunpack.c.l.b16 %v244
    %v281 = vunpack.c.l.b16 %v245
    %v282 = vpack.c.b16 %v267, %v266
    %v283 = vpack.c.b16 %v269, %v268
    %v284 = vpack.c.b16 %v271, %v270
    %v285 = vpack.c.b16 %v273, %v272
    %v286 = vpack.c.b16 %v275, %v274
    %v287 = vpack.c.b16 %v277, %v276
    %v288 = vpack.c.b16 %v279, %v278
    %v289 = vpack.c.b16 %v281, %v280
    %298 = vmatpush.bf16.msra.mxu0 %v289
    %299 = vmatpush.bf16.msra.mxu0 %v288
    %300 = vmatpush.bf16.msra.mxu0 %v287
    %301 = vmatpush.bf16.msra.mxu0 %v286
    %302 = vmatpush.bf16.msra.mxu0 %v285
    %303 = vmatpush.bf16.msra.mxu0 %v284
    %304 = vmatpush.bf16.msra.mxu0 %v283
    %305 = vmatpush.bf16.msra.mxu0 %v282
    %306 = vmatmul.bf16.gmra.mxu0 %v229
    %v307 = vpop.f32.mrf.mxu0
    %v308 = vadd.f32 %v248, %v307
    %v309 = vpop.f32.mrf.mxu0
    %310 = vdwg.mxu0
    %311 = vst [vmem:[#allocation8] sm:$0xff] %v308
    // Predicated region
    $region34: #{tpu_custom_call.1} parent=1 // pred_check
      _
    $region35: #{tpu_custom_call.1} parent=1 // pred_check_branch
      %313 = sbr.rel (0) target = $region37
    $region36: #{tpu_custom_call.1} parent=1 // pred_region
      %315 = vsyncadd [#allocation4], 0
      %s317 = sshll.u32 [#allocation8], 4
      %s318 = int_to_ptr.vmem [resolvable:$true] %s317
      %s319 = sshll.u32 %s5, 4
      %s320 = int_to_ptr.hbm [resolvable:$true] %s319
      %322 = dma.vmem_to_hbm [thread:$0]  %s318, 128, %s320, [#allocation4]
    $region37: #{tpu_custom_call.1} parent=1 // pred_fallthru
      _
    // Predicated region
    $region38: #{tpu_custom_call.1} parent=1 // pred_check
      _
    $region39: #{tpu_custom_call.1} parent=1 // pred_check_branch
      %324 = sbr.rel (0) target = $region41
    $region40: #{tpu_custom_call.1} parent=1 // pred_region
      %326 = dma.done [#allocation4], 128
    $region41: #{tpu_custom_call.1} parent=1 // pred_fallthru
      _
    %327 = vsyncpa [#allocation3], 1
    %328 = vsyncpa [#allocation6], 1
    %329 = vsyncpa [#allocation4], 1

</llo_original>
